<compile_context>
chip_gen: v5e
topology: v5e:2x2
jax: 0.10.0
libtpu: 0.0.40
codegen_flags: <defaults>
</compile_context>

<pallas_src>
import functools
import math

import jax
import jax.numpy as jnp
from jax.experimental import pallas as pl
from jax.experimental.pallas import tpu as pltpu


def _gelu_kernel(x_ref, o_ref, *, compute_dtype):
    x = x_ref[...].astype(compute_dtype)
    one = jnp.asarray(1.0, compute_dtype)
    c2 = jnp.asarray(2.0 * math.sqrt(2.0 / math.pi), compute_dtype)
    a = jnp.asarray(0.044715, compute_dtype)
    u = c2 * (x + a * (x * x * x))
    # GELU_tanh(x) = 0.5*x*(1 + tanh(c*(x + 0.044715 x^3))) == x * sigmoid(2c*(...))
    y = x * (one / (one + jnp.exp(-u)))
    o_ref[...] = y.astype(o_ref.dtype)


def _compute_dtype_for(x_dtype):
    """Native bf16 math on v6e/v7x (bf16 VPU/EUP); f32 upcast on v5e/older."""
    if jnp.dtype(x_dtype) != jnp.dtype(jnp.bfloat16):
        return jnp.float32
    try:
        kind = jax.devices()[0].device_kind.lower()
    except Exception:
        return jnp.float32
    if "v6" in kind or "v7" in kind:
        return jnp.bfloat16
    return jnp.float32


def gelu_pallas(x, *, target_block_bytes=4 << 20):
    """Tanh-approximate GELU on TPU via Pallas (elementwise, layout-agnostic)."""
    orig_shape = x.shape
    n = x.size
    if n == 0:
        return x

    # ---- lane-dense 2D factorization: (rows, L), L a wide multiple of 128 ----
    L = None
    for cand in (4096, 2048, 1024, 512, 256, 128):
        if n % cand == 0:
            L = cand
            break
    if L is None:
        # Odd total size: fall back to the natural (rows, last_dim) layout.
        L = orig_shape[-1] if len(orig_shape) > 1 else n
    rows = n // L
    x2 = x.reshape(rows, L)

    # ---- block sizing by bytes (double-buffered in+out must fit VMEM) ----
    itemsize = jnp.dtype(x.dtype).itemsize
    row_bytes = L * itemsize
    tr = min(rows, max(1, target_block_bytes // row_bytes))
    if tr < rows:
        tr = (tr // 8) * 8          # sublane-aligned tiles for partial grids
        if tr < 8:
            tr = rows               # pathological huge-row case: single block
    num_blocks = pl.cdiv(rows, tr)
    # Keep >= 2 blocks when possible so v7x megacore uses both TensorCores.
    if num_blocks == 1 and rows >= 16:
        tr = max(8, (((rows + 1) // 2) // 8) * 8)
        num_blocks = pl.cdiv(rows, tr)

    kernel = functools.partial(_gelu_kernel,
                               compute_dtype=_compute_dtype_for(x.dtype))

    out = pl.pallas_call(
        kernel,
        out_shape=jax.ShapeDtypeStruct((rows, L), x.dtype),
        grid_spec=pltpu.PrefetchScalarGridSpec(
            num_scalar_prefetch=0,
            grid=(num_blocks,),
            in_specs=[pl.BlockSpec((tr, L), lambda i: (i, 0))],
            out_specs=pl.BlockSpec((tr, L), lambda i: (i, 0)),
        ),
        compiler_params=pltpu.CompilerParams(
            dimension_semantics=("parallel",),
            vmem_limit_bytes=32 * 1024 * 1024,
        ),
    )(x2)
    return out.reshape(orig_shape)


def gelu_ref(x):
    xf = x.astype(jnp.float32)
    c = jnp.sqrt(jnp.float32(2.0 / jnp.pi))
    return (0.5 * xf * (1.0 + jnp.tanh(c * (xf + 0.044715 * xf ** 3)))).astype(x.dtype)


if __name__ == "__main__":
    key = jax.random.PRNGKey(0)
    # Shape consistent with a transformer feed-forward input: (batch, seq, emb)
    x = jax.random.normal(key, (2, 8, 32), dtype=jnp.float32)

    y = jax.block_until_ready(gelu_pallas(x))

    y_ref = gelu_ref(x)
    assert y.shape == x.shape and y.dtype == x.dtype
    assert float(jnp.max(jnp.abs(y - y_ref))) < 1e-5

    print("KERNEL_OK")
</pallas_src>

<mosaic_0001>
module attributes {stable_mosaic.version = 11 : i64} {
  func.func @_gelu_kernel(%arg0: i32, %arg1: memref<1x512xf32, #tpu.memory_space<vmem>>, %arg2: memref<1x512xf32, #tpu.memory_space<vmem>>) attributes {dimension_semantics = [#tpu.dimension_semantics<parallel>], iteration_bounds = array<i64: 1>, scalar_prefetch = 0 : i64, scratch_operands = 0 : i64, tpu.core_type = #tpu.core_type<tc>, window_params = [{transform_indices = @transform_0, window_bounds = array<i64: 1, 512>}, {transform_indices = @transform_1, window_bounds = array<i64: 1, 512>}]} {
    %c0 = arith.constant 0 : index
    %c0_0 = arith.constant 0 : index
    %0 = vector.load %arg1[%c0, %c0_0] : memref<1x512xf32, #tpu.memory_space<vmem>>, vector<1x512xf32>
    %1 = arith.mulf %0, %0 : vector<1x512xf32>
    %2 = arith.mulf %1, %0 : vector<1x512xf32>
    %cst = arith.constant 4.471500e-02 : f32
    %3 = vector.broadcast %cst : f32 to vector<1x512xf32>
    %4 = arith.mulf %3, %2 : vector<1x512xf32>
    %5 = arith.addf %0, %4 : vector<1x512xf32>
    %cst_1 = arith.constant 1.59576917 : f32
    %6 = vector.broadcast %cst_1 : f32 to vector<1x512xf32>
    %7 = arith.mulf %6, %5 : vector<1x512xf32>
    %cst_2 = arith.constant 0.000000e+00 : f32
    %8 = vector.broadcast %cst_2 : f32 to vector<1x512xf32>
    %9 = arith.subf %8, %7 : vector<1x512xf32>
    %10 = math.exp %9 : vector<1x512xf32>
    %cst_3 = arith.constant 1.000000e+00 : f32
    %11 = vector.broadcast %cst_3 : f32 to vector<1x512xf32>
    %12 = arith.addf %11, %10 : vector<1x512xf32>
    %cst_4 = arith.constant 1.000000e+00 : f32
    %13 = vector.broadcast %cst_4 : f32 to vector<1x512xf32>
    %14 = arith.divf %13, %12 : vector<1x512xf32>
    %15 = arith.mulf %0, %14 : vector<1x512xf32>
    %c0_5 = arith.constant 0 : index
    %c0_6 = arith.constant 0 : index
    %16 = vector.load %arg2[%c0_5, %c0_6] : memref<1x512xf32, #tpu.memory_space<vmem>>, vector<1x512xf32>
    tpu.vector_store %arg2[%c0_5, %c0_6], %15 {strides = array<i32>} : memref<1x512xf32, #tpu.memory_space<vmem>>, vector<1x512xf32>,
    return
  }
  func.func @transform_0(%arg0: i32) -> (i32, i32) {
    %c0_i32 = arith.constant 0 : i32
    %c0_i32_0 = arith.constant 0 : i32
    return %arg0, %c0_i32 : i32, i32
  }
  func.func @transform_1(%arg0: i32) -> (i32, i32) {
    %c0_i32 = arith.constant 0 : i32
    %c0_i32_0 = arith.constant 0 : i32
    return %arg0, %c0_i32 : i32, i32
  }
}

</mosaic_0001>

<llo_original>
// kernel: tpu_custom_call.1
$region0: #{tpu_custom_call.1}
  #allocation0 [shape = 'u32[]', space=smem, size = 0x4, offset = 0x4, fixed_abs, tag = 'smem constant byte address 0x4 - core index']
  #allocation1 [shape = 'u32[72,128]{1,0:T(1,128)}', space=vmem, size = 0x9000, scoped, tag = 'internal scratch']
  %s0 = inlined_call_operand.hbm [shape: f32[1,512], index: 0, kind: input, shape index: {}]
  %s1 = inlined_call_operand.hbm [shape: f32[1,512], index: 1, kind: output, shape index: {}]
  %s2 = sld [smem:[#allocation0]]
  $region18: #{tpu_custom_call.1} parent=0
    _
  %s4 = ssub.s32 1, %s2
  %s5 = scalar_select 0, %s4, %s2
  $region1: #{tpu_custom_call.1} parent=0
    #allocation2 [shape = 'u8[2048]{0}', space=vmem, size = 0x800, scoped, tag = 'input window, operand 0, single buffered']
    #allocation3 [shape = 's32[1]{0}', space=sflag, size = 0x4, scoped, tag = 'scoped memory for tpu_custom_call.1']
    #allocation4 [shape = 's32[1]{0}', space=sflag, size = 0x4, scoped, tag = 'scoped memory for tpu_custom_call.1']
    #allocation5 [shape = 'u8[2048]{0}', space=vmem, size = 0x800, scoped, tag = 'output window, operand 0, single buffered']
    %6 = vsyncpa [#allocation3], 0
    %7 = vsyncpa [#allocation4], 0
    // Predicated region
    $region2: #{tpu_custom_call.1} parent=1 // pred_check
      _
    $region3: #{tpu_custom_call.1} parent=1 // pred_check_branch
      %9 = sbr.rel (0) target = $region5
    $region4: #{tpu_custom_call.1} parent=1 // pred_region
      %11 = vsyncadd [#allocation3], 0
      %s13 = sshll.u32 %s0, 4
      %s14 = int_to_ptr.hbm [resolvable:$true] %s13
      %s15 = sshll.u32 [#allocation2], 4
      %s16 = int_to_ptr.vmem [resolvable:$true] %s15
      %18 = dma.hbm_to_vmem [thread:$0]  %s14, 64, %s16, [#allocation3]
    $region5: #{tpu_custom_call.1} parent=1 // pred_fallthru
      _
    // Predicated region
    $region6: #{tpu_custom_call.1} parent=1 // pred_check
      _
    $region7: #{tpu_custom_call.1} parent=1 // pred_check_branch
      %20 = sbr.rel (0) target = $region9
    $region8: #{tpu_custom_call.1} parent=1 // pred_region
      %22 = dma.done [#allocation3], 64
    $region9: #{tpu_custom_call.1} parent=1 // pred_fallthru
      _
    %v23 = vld [vmem:[#allocation2] sm:$0xf]
    %v24 = vmul.f32 %v23, %v23
    %v25 = vmul.f32 %v24, %v23
    %v26 = vmul.f32 %v25, 0.044715
    %v27 = vadd.f32 %v23, %v26
    %v28 = vmul.f32 %v27, 1.5957692
    %v29 = vsub.f32 0.0, %v28
    %v30 = vmul.f32 %v29, 1.442695
    %v31 = vpow.pop %v30
    %v32 = vadd.f32 %v31, 1.0
    %v33 = vrcp.pop %v32
    %v34 = vmul.f32 %v32, %v33
    %v35 = vsub.f32 1.0, %v34
    %v36 = vmul.f32 %v33, %v35
    %v37 = vadd.f32 %v33, %v36
    %vm38 = vweird.f32 %v32
    %vm39 = vweird.f32 %v33
    %vm40 = vmor %vm38, %vm39
    %v41 = vsel %vm40, %v33, %v37
    %v42 = vand.u32 2147483647, %v32
    %vm43 = vcmp.eq.f32.partialorder %v42, 8.507059e+37
    %v44 = vand.u32 %v32, 2147483648
    %v45 = vor.u32 1.1754944e-38, %v44
    %v46 = vsel %vm43, %v45, %v41
    %v47 = vmul.f32 1.0, %v46
    %v48 = vmul.f32 %v23, %v47
    %v49 = vlaneseq
    %vm50 = vcmp.ge.s32.totalorder %v49, 0
    %vm51 = vcmp.lt.s32.totalorder %v49, 512
    %vm52 = vmand %vm50, %vm51
    %53 = vst.msk [vmem:[#allocation5] sm:$0xf] %vm52, %v48
    // Predicated region
    $region10: #{tpu_custom_call.1} parent=1 // pred_check
      _
    $region11: #{tpu_custom_call.1} parent=1 // pred_check_branch
      %55 = sbr.rel (0) target = $region13
    $region12: #{tpu_custom_call.1} parent=1 // pred_region
      %57 = vsyncadd [#allocation4], 0
      %s59 = sshll.u32 [#allocation5], 4
      %s60 = int_to_ptr.vmem [resolvable:$true] %s59
      %s61 = sshll.u32 %s1, 4
      %s62 = int_to_ptr.hbm [resolvable:$true] %s61
      %64 = dma.vmem_to_hbm [thread:$0]  %s60, 64, %s62, [#allocation4]
    $region13: #{tpu_custom_call.1} parent=1 // pred_fallthru
      _
    // Predicated region
    $region14: #{tpu_custom_call.1} parent=1 // pred_check
      _
    $region15: #{tpu_custom_call.1} parent=1 // pred_check_branch
      %66 = sbr.rel (0) target = $region17
    $region16: #{tpu_custom_call.1} parent=1 // pred_region
      %68 = dma.done [#allocation4], 64
    $region17: #{tpu_custom_call.1} parent=1 // pred_fallthru
      _
    %69 = vsyncpa [#allocation3], 1
    %70 = vsyncpa [#allocation4], 1

</llo_original>
